<compile_context>
chip_gen: v7x
topology: tpu7x:2x2x1
jax: 0.10.0
libtpu: 0.0.40
codegen_flags: <defaults>
</compile_context>

<pallas_src>
import functools

import jax
import jax.numpy as jnp
from jax.experimental import pallas as pl
from jax.experimental.pallas import tpu as pltpu

_IN_FEATURES = 100
_HIDDEN = 25
_TB_MAX = 8192  # rows per batch tile (f32 x tile = 8192*128*4B = 4 MiB per buffer)


def _round_up(n: int, m: int) -> int:
    return ((n + m - 1) // m) * m


def basic_model_kernel(x_ref, w_ref, c_ref, out_ref, psum_ref, *, batch, tile, mask_last):
    # One MXU pass per batch tile:
    #   z[:, 0] = x @ (w1 @ w2)          -> linear2 logit (bias added below)
    #   z[:, 1] = x @ sum(w1, axis=1)    -> per-row sum of the hidden pre-activation
    z = jnp.dot(x_ref[...], w_ref[...], preferred_element_type=jnp.float32)  # (TB, 2) f32
    # c = b1 @ w2 + b2 : scalar read from SMEM, broadcast on the VPU.
    out_ref[...] = jax.nn.sigmoid(z[:, 0:1] + c_ref[0])

    z_sum = z[:, 1:2]
    if mask_last:
        # Unpadded x: the last tile's trailing rows are stale DMA-buffer contents.
        # Mask them out of the partial sum (their output rows are clamped on write-back).
        rows = pl.program_id(0) * tile + jax.lax.broadcasted_iota(jnp.int32, (tile, 1), 0)
        z_sum = jnp.where(rows < batch, z_sum, jnp.float32(0.0))
    # Per-tile partial of sum(linear1(x)); cross-sublane reduce (XLU slot, idle here).
    psum_ref[0] = jnp.sum(z_sum, axis=0, keepdims=True)


@functools.partial(jax.jit, static_argnames=("tb_max",))
def basic_model_forward(x, w1, b1, w2, b2, *, tb_max=_TB_MAX):
    """Returns (sigmoid(linear2(linear1(x))) with shape [B,1], sum(linear1(x)) scalar)."""
    B = x.shape[0]

    # Stream x in its native dtype -- never pay a wrapper-side astype pass over HBM.
    if x.dtype not in (jnp.dtype(jnp.float32), jnp.dtype(jnp.bfloat16)):
        x = x.astype(jnp.float32)
    stream_dtype = x.dtype
    itemsize = jnp.dtype(stream_dtype).itemsize

    # ---- algebraic fold (exact in real arithmetic, ~5K flops, done once per call) ----
    w_logit = w1 @ w2                                    # (100, 1)
    w_rowsum = jnp.sum(w1, axis=1, keepdims=True)        # (100, 1)
    W = jnp.concatenate([w_logit, w_rowsum], axis=1).astype(stream_dtype)   # (100, 2)
    c = (b1 @ w2 + b2).reshape((1,)).astype(jnp.float32)  # fused output bias (SMEM scalar)
    s_b = jnp.sum(b1).astype(jnp.float32)                 # bias contribution to sum(hidden)

    # ---- batch tiling: balanced tiles, even count when multi-tile (v7x megacore) ----
    tiles = max(1, -(-B // tb_max))
    if tiles > 1 and tiles % 2 == 1:
        tiles += 1                                  # even count -> both v7x TCs get equal work
    if tiles == 1:
        tb = B                                      # full-dim block: exempt from (8/16,128) rule
    else:
        tb = _round_up(-(-B // tiles), 16)          # multiple of 16: safe for f32 and bf16 layouts
    tiles = max(1, -(-B // tb))                     # drop any fully-empty trailing tile
    needs_mask = tiles * tb != B

    # ---- explicit scoped-VMEM budget: 2x x-buffers + 2x lane-padded (TB,1) out + slack ----
    vmem_bytes = 2 * tb * 128 * itemsize + 2 * tb * 128 * 4 + (2 << 20)
    vmem_bytes = max(int(vmem_bytes), 16 << 20)

    cost = pl.CostEstimate(
        flops=4 * B * _IN_FEATURES,                 # x @ (100, 2)
        transcendentals=B,                          # sigmoid
        bytes_accessed=B * (_IN_FEATURES * itemsize + 4) + _IN_FEATURES * 2 * itemsize + 4 * tiles,
    )

    out, psums = pl.pallas_call(
        functools.partial(basic_model_kernel, batch=B, tile=tb, mask_last=needs_mask),
        out_shape=(
            jax.ShapeDtypeStruct((B, 1), jnp.float32),         # sigmoid output (unpadded)
            jax.ShapeDtypeStruct((tiles, 1, 1), jnp.float32),  # per-tile partial sums
        ),
        grid=(tiles,),
        in_specs=[
            pl.BlockSpec((tb, _IN_FEATURES), lambda i: (i, 0)),   # x: streamed per tile
            pl.BlockSpec((_IN_FEATURES, 2), lambda i: (0, 0)),    # folded weights: resident
            pl.BlockSpec(memory_space=pltpu.MemorySpace.SMEM),    # fused bias scalar
        ],
        out_specs=(
            pl.BlockSpec((tb, 1), lambda i: (i, 0)),
            pl.BlockSpec((1, 1, 1), lambda i: (i, 0, 0)),
        ),
        compiler_params=pltpu.CompilerParams(
            # Independent batch tiles -> shard grid steps across v7x's 2 TensorCores
            # (harmless no-op on v5e/v6e).
            dimension_semantics=("parallel",),
            vmem_limit_bytes=vmem_bytes,
        ),
        cost_estimate=cost,
    )(x, W, c)

    mock_sum = jnp.sum(psums) + jnp.float32(B) * s_b
    return out, mock_sum


def init_params(key):
    """Deterministic init mimicking nn.Linear defaults (uniform +/- 1/sqrt(fan_in))."""
    k1, k2, k3, k4 = jax.random.split(key, 4)
    bound1 = 1.0 / jnp.sqrt(100.0)
    bound2 = 1.0 / jnp.sqrt(25.0)
    # Stored as [in, out] (transpose of PyTorch's [out, in]) so forward does x @ W.
    w1 = jax.random.uniform(k1, (100, 25), jnp.float32, -bound1, bound1)
    b1 = jax.random.uniform(k2, (1, 25), jnp.float32, -bound1, bound1)
    w2 = jax.random.uniform(k3, (25, 1), jnp.float32, -bound2, bound2)
    b2 = jax.random.uniform(k4, (1, 1), jnp.float32, -bound2, bound2)
    return w1, b1, w2, b2


if __name__ == "__main__":
    key = jax.random.PRNGKey(0)
    kx, kp, kx2 = jax.random.split(key, 3)
    w1, b1, w2, b2 = init_params(kp)

    def reference(x):
        h = x @ w1 + b1
        return jax.nn.sigmoid(h @ w2 + b2), jnp.sum(h)

    # --- small batch: single full-dim tile, no masking ---
    B = 8
    x = jax.random.normal(kx, (B, 100), jnp.float32)
    out_ref, sum_ref = reference(x)
    out, mock_sum = basic_model_forward(x, w1, b1, w2, b2)
    out = jax.block_until_ready(out)
    mock_sum = jax.block_until_ready(mock_sum)
    assert out.shape == (B, 1)
    assert jnp.allclose(out, out_ref, atol=1e-4, rtol=1e-4)
    assert jnp.allclose(mock_sum, sum_ref, atol=1e-3, rtol=1e-4)

    # --- multi-tile, non-tile-aligned batch: exercises the in-kernel row mask and the
    #     even tile count (tb_max shrunk so the demo shapes stay small) ---
    B2 = 300
    x2 = jax.random.normal(kx2, (B2, 100), jnp.float32)
    out_ref2, sum_ref2 = reference(x2)
    out2, sum2 = basic_model_forward(x2, w1, b1, w2, b2, tb_max=128)
    out2 = jax.block_until_ready(out2)
    sum2 = jax.block_until_ready(sum2)
    assert out2.shape == (B2, 1)
    assert jnp.allclose(out2, out_ref2, atol=1e-4, rtol=1e-4)
    assert jnp.allclose(sum2, sum_ref2, atol=5e-2, rtol=1e-4)

    # --- bf16-native input: streams without any wrapper-side cast (looser tolerance) ---
    x_bf = x.astype(jnp.bfloat16)
    out_rbf, sum_rbf = reference(x_bf.astype(jnp.float32))
    out_bf, sum_bf = basic_model_forward(x_bf, w1, b1, w2, b2)
    out_bf = jax.block_until_ready(out_bf)
    sum_bf = jax.block_until_ready(sum_bf)
    assert jnp.allclose(out_bf, out_rbf, atol=3e-2, rtol=3e-2)
    assert jnp.allclose(sum_bf, sum_rbf, atol=1.0, rtol=5e-2)

    print("KERNEL_OK")
</pallas_src>

<mosaic_0001>
module attributes {stable_mosaic.version = 11 : i64} {
  func.func @basic_model_kernel(%arg0: i32, %arg1: memref<8x100xf32, #tpu.memory_space<vmem>>, %arg2: memref<100x2xf32, #tpu.memory_space<vmem>>, %arg3: memref<1xf32, #tpu.memory_space<smem>>, %arg4: memref<8x1xf32, #tpu.memory_space<vmem>>, %arg5: memref<1x1x1xf32, #tpu.memory_space<vmem>>) attributes {dimension_semantics = [#tpu.dimension_semantics<parallel>], iteration_bounds = array<i64: 1>, scalar_prefetch = 0 : i64, scratch_operands = 0 : i64, tpu.core_type = #tpu.core_type<tc>, window_params = [{transform_indices = @transform_0, window_bounds = array<i64: 8, 100>}, {pipeline_mode = #tpu.pipeline_mode<synchronous>, transform_indices = @transform_1, window_bounds = array<i64: 100, 2>}, {transform_indices = @transform_2, window_bounds = array<i64: 1>}, {transform_indices = @transform_3, window_bounds = array<i64: 8, 1>}, {transform_indices = @transform_4, window_bounds = array<i64: 1, 1, 1>}]} {
    %c0 = arith.constant 0 : index
    %c0_0 = arith.constant 0 : index
    %0 = vector.load %arg1[%c0, %c0_0] : memref<8x100xf32, #tpu.memory_space<vmem>>, vector<8x100xf32>
    %c0_1 = arith.constant 0 : index
    %c0_2 = arith.constant 0 : index
    %1 = vector.load %arg2[%c0_1, %c0_2] : memref<100x2xf32, #tpu.memory_space<vmem>>, vector<100x2xf32>
    %cst = arith.constant dense<0.000000e+00> : vector<8x2xf32>
    %2 = tpu.matmul %0, %1, %cst {dimension_numbers = #tpu.dot_dimension_numbers<[1], [0], [0], [1], [0, 0, 1, 1], [], []>} : vector<8x100xf32>, vector<100x2xf32>, vector<8x2xf32> -> vector<8x2xf32>
    %3 = vector.extract_strided_slice %2 {offsets = [0, 0], sizes = [8, 1], strides = [1, 1]} : vector<8x2xf32> to vector<8x1xf32>
    %c0_3 = arith.constant 0 : index
    %4 = memref.load %arg3[%c0_3] : memref<1xf32, #tpu.memory_space<smem>>
    %5 = vector.broadcast %4 : f32 to vector<8x1xf32>
    %6 = arith.addf %3, %5 : vector<8x1xf32>
    %7 = arith.negf %6 : vector<8x1xf32>
    %8 = math.exp %7 : vector<8x1xf32>
    %cst_4 = arith.constant 1.000000e+00 : f32
    %9 = vector.broadcast %cst_4 : f32 to vector<8x1xf32>
    %10 = arith.addf %9, %8 : vector<8x1xf32>
    %11 = arith.divf %9, %10 : vector<8x1xf32>
    %c0_5 = arith.constant 0 : index
    %c0_6 = arith.constant 0 : index
    %12 = vector.load %arg4[%c0_5, %c0_6] : memref<8x1xf32, #tpu.memory_space<vmem>>, vector<8x1xf32>
    tpu.vector_store %arg4[%c0_5, %c0_6], %11 {strides = array<i32>} : memref<8x1xf32, #tpu.memory_space<vmem>>, vector<8x1xf32>,
    %13 = vector.extract_strided_slice %2 {offsets = [0, 1], sizes = [8, 1], strides = [1, 1]} : vector<8x2xf32> to vector<8x1xf32>
    %cst_7 = arith.constant dense<0.000000e+00> : vector<1xf32>
    %14 = vector.multi_reduction <add>, %13, %cst_7 [0] : vector<8x1xf32> to vector<1xf32>
    %15 = vector.shape_cast %14 : vector<1xf32> to vector<1x1xf32>
    %c0_8 = arith.constant 0 : index
    %c0_9 = arith.constant 0 : index
    %c0_10 = arith.constant 0 : index
    %16 = vector.load %arg5[%c0_8, %c0_9, %c0_10] : memref<1x1x1xf32, #tpu.memory_space<vmem>>, vector<1x1x1xf32>
    %17 = vector.shape_cast %16 : vector<1x1x1xf32> to vector<1x1xf32>
    %18 = vector.shape_cast %15 : vector<1x1xf32> to vector<1x1x1xf32>
    tpu.vector_store %arg5[%c0_8, %c0_9, %c0_10], %18 {strides = array<i32>} : memref<1x1x1xf32, #tpu.memory_space<vmem>>, vector<1x1x1xf32>,
    return
  }
  func.func @transform_0(%arg0: i32) -> (i32, i32) {
    %c0_i32 = arith.constant 0 : i32
    %c0_i32_0 = arith.constant 0 : i32
    return %arg0, %c0_i32 : i32, i32
  }
  func.func @transform_1(%arg0: i32) -> (i32, i32) {
    %c0_i32 = arith.constant 0 : i32
    %c0_i32_0 = arith.constant 0 : i32
    %c0_i32_1 = arith.constant 0 : i32
    return %c0_i32, %c0_i32_0 : i32, i32
  }
  func.func @transform_2(%arg0: i32) -> i32 {
    %c0_i32 = arith.constant 0 : i32
    %c0_i32_0 = arith.constant 0 : i32
    return %c0_i32 : i32
  }
  func.func @transform_3(%arg0: i32) -> (i32, i32) {
    %c0_i32 = arith.constant 0 : i32
    %c0_i32_0 = arith.constant 0 : i32
    return %arg0, %c0_i32 : i32, i32
  }
  func.func @transform_4(%arg0: i32) -> (i32, i32, i32) {
    %c0_i32 = arith.constant 0 : i32
    %c0_i32_0 = arith.constant 0 : i32
    %c0_i32_1 = arith.constant 0 : i32
    return %arg0, %c0_i32, %c0_i32_0 : i32, i32, i32
  }
}

</mosaic_0001>

<llo_original>
// kernel: basic_model_forward.1
$region0: #{basic_model_forward.1}
  #allocation0 [shape = 'u32[]', space=smem, size = 0x4, offset = 0x4, fixed_abs, tag = 'smem constant byte address 0x4 - core index']
  #allocation1 [shape = 'u32[144,128]{1,0:T(1,128)}', space=vmem, size = 0x12000, scoped, tag = 'internal scratch']
  #allocation2 [shape = 'f32[1]{0:T(128)S(6)}', space=smem, size = 0x200, scoped, tag = 'scoped memory for basic_model_forward.1']
  %s0 = inlined_call_operand.vmem [shape: f32[8,100], index: 0, kind: input, shape index: {}]
  %s1 = inlined_call_operand.vmem [shape: f32[100,2], index: 1, kind: input, shape index: {}]
  %s2 = inlined_call_operand.<no memory space> [shape: f32[1], index: 2, kind: input, shape index: {}]
  %s3 = inlined_call_operand.vmem [shape: f32[8,1], index: 3, kind: output, shape index: {0}]
  %s4 = inlined_call_operand.hbm [shape: f32[1,1,1], index: 4, kind: output, shape index: {1}]
  %5 = xla_tuple %s3, %s4
  %s6 = sld [smem:[#allocation0]]
  $region30: #{basic_model_forward.1} parent=0
    _
  %s8 = ssub.s32 1, %s6
  %s9 = scalar_select 0, %s8, %s6
  %10 = sst [smem:[#allocation2]] %s2
  $region1: #{basic_model_forward.1} parent=0
    #allocation3 [shape = 'u8[512]{0}', space=vmem, size = 0x400, scoped, tag = 'output window, operand 1, single buffered']
    #allocation4 [shape = 's32[1]{0}', space=sflag, size = 0x4, scoped, tag = 'scoped memory for basic_model_forward.1']
    %11 = vsyncpa [#allocation4], 0
    // Predicated region
    $region2: #{basic_model_forward.1} parent=1 // pred_check
      _
    $region3: #{basic_model_forward.1} parent=1 // pred_check_branch
      %13 = sbr.rel (0) target = $region5
    $region4: #{basic_model_forward.1} parent=1 // pred_region
      _
    $region5: #{basic_model_forward.1} parent=1 // pred_fallthru
      _
    // Predicated region
    $region6: #{basic_model_forward.1} parent=1 // pred_check
      _
    $region7: #{basic_model_forward.1} parent=1 // pred_check_branch
      %15 = sbr.rel (0) target = $region9
    $region8: #{basic_model_forward.1} parent=1 // pred_region
      _
    $region9: #{basic_model_forward.1} parent=1 // pred_fallthru
      _
    // Predicated region
    $region10: #{basic_model_forward.1} parent=1 // pred_check
      _
    $region11: #{basic_model_forward.1} parent=1 // pred_check_branch
      %17 = sbr.rel (0) target = $region13
    $region12: #{basic_model_forward.1} parent=1 // pred_region
      _
    $region13: #{basic_model_forward.1} parent=1 // pred_fallthru
      _
    %v18 = vld [vmem:[%s0] sm:$0xff]
    %v19 = vld [vmem:[%s1] sm:$0xff]
    %v20 = vld [vmem:[%s1 + $0x8] sm:$0xff]
    %v21 = vld [vmem:[%s1 + $0x10] sm:$0xff]
    %v22 = vld [vmem:[%s1 + $0x18] sm:$0xff]
    %v23 = vld [vmem:[%s1 + $0x20] sm:$0xff]
    %v24 = vld [vmem:[%s1 + $0x28] sm:$0xff]
    %v25 = vld [vmem:[%s1 + $0x30] sm:$0xff]
    %v26 = vld [vmem:[%s1 + $0x38] sm:$0xff]
    %v27 = vld [vmem:[%s1 + $0x40] sm:$0xff]
    %v28 = vld [vmem:[%s1 + $0x48] sm:$0xff]
    %v29 = vld [vmem:[%s1 + $0x50] sm:$0xff]
    %v30 = vld [vmem:[%s1 + $0x58] sm:$0xff]
    %v31 = vld [vmem:[%s1 + $0x60] sm:$0xf]
    %vm32 = vcmask 818176
    %v34 = vsel %vm32, %v18, 0
    %vm36 = vcmask 1043456
    %v38 = vsel %vm36, %v31, 0
    %40 = vmatprep.subr.mxu0 0.0
    %41 = vmatpush1.msra.mxu0 %v19
    %42 = vmatprep.subr.mxu0 0.0
    %43 = vmatpush1.msra.mxu0 %v20
    %44 = vmatprep.subr.mxu0 0.0
    %45 = vmatpush1.msra.mxu0 %v21
    %46 = vmatprep.subr.mxu0 0.0
    %47 = vmatpush1.msra.mxu0 %v22
    %48 = vmatprep.subr.mxu0 0.0
    %49 = vmatpush1.msra.mxu0 %v23
    %50 = vmatprep.subr.mxu0 0.0
    %51 = vmatpush1.msra.mxu0 %v24
    %52 = vmatprep.subr.mxu0 0.0
    %53 = vmatpush1.msra.mxu0 %v25
    %54 = vmatprep.subr.mxu0 0.0
    %55 = vmatpush1.msra.mxu0 %v26
    %56 = vmatprep.subr.mxu0 0.0
    %57 = vmatpush1.msra.mxu0 %v27
    %58 = vmatprep.subr.mxu0 0.0
    %59 = vmatpush1.msra.mxu0 %v28
    %60 = vmatprep.subr.mxu0 0.0
    %61 = vmatpush1.msra.mxu0 %v29
    %62 = vmatprep.subr.mxu0 0.0
    %63 = vmatpush1.msra.mxu0 %v30
    %64 = vmatprep.subr.mxu0 0.0
    %65 = vmatpush1.msra.mxu0 %v38
    %66 = vmatprep.subr.mxu0 0.0
    %67 = vmatpush1.msra.mxu0 0.0
    %68 = vmatprep.subr.mxu0 0.0
    %69 = vmatpush1.msra.mxu0 0.0
    %70 = vmatprep.subr.mxu0 0.0
    %71 = vmatpush1.msra.mxu0 0.0
    %72 = vmatprep.subr.mxu0 0.0
    %73 = vmatpush1.msra.mxu0 0.0
    %74 = vmatprep.subr.mxu0 0.0
    %75 = vmatpush1.msra.mxu0 0.0
    %76 = vmatprep.subr.mxu0 0.0
    %77 = vmatpush1.msra.mxu0 0.0
    %78 = vmatprep.subr.mxu0 0.0
    %79 = vmatpush1.msra.mxu0 0.0
    %80 = vmatprep.subr.mxu0 0.0
    %81 = vmatpush1.msra.mxu0 0.0
    %82 = vmatprep.subr.mxu0 0.0
    %83 = vmatpush1.msra.mxu0 0.0
    %84 = vmatprep.subr.mxu0 0.0
    %85 = vmatpush1.msra.mxu0 0.0
    %86 = vmatprep.subr.mxu0 0.0
    %87 = vmatpush1.msra.mxu0 0.0
    %88 = vmatprep.subr.mxu0 0.0
    %89 = vmatpush1.msra.mxu0 0.0
    %90 = vmatprep.subr.mxu0 0.0
    %91 = vmatpush1.msra.mxu0 0.0
    %92 = vmatprep.subr.mxu0 0.0
    %93 = vmatpush1.msra.mxu0 0.0
    %94 = vmatprep.subr.mxu0 0.0
    %95 = vmatpush1.msra.mxu0 0.0
    %96 = vmatprep.subr.mxu0 0.0
    %97 = vmatpush1.msra.mxu0 0.0
    %98 = vmatprep.subr.mxu0 0.0
    %99 = vmatpush1.msra.mxu0 0.0
    %100 = vmatprep.subr.mxu0 0.0
    %101 = vmatpush1.msra.mxu0 0.0
    %102 = vmatprep.subr.mxu0 0.0
    %103 = vmatpush1.msra.mxu0 0.0
    %104 = vmatprep.mubr.f32.mxu0 0.0
    %105 = vmatmul.mubr.f32.gmra.mrb[0].mxu0 %v34
    %v106 = vpop.f32.mrb[0].mxu0
    %v107 = vadd.f32 0.0, %v106
    %v108 = vpop.f32.mrb[0].mxu0
    %109 = vdwg.mxu0
    %s110 = sld [smem:[#allocation2]]
    %v111 = vstv %s110
    %v112 = vadd.f32 %v107, %v111
    %v113 = vxor.u32 %v112, 2147483648
    %v114 = vmul.f32 %v113, 1.442695
    %v115 = vpow.pop %v114
    %v116 = vadd.f32 %v115, 1.0
    %v117 = vrcp.pop %v116
    %v118 = vmul.f32 1.0, %v117
    %vm119 = vcmask 7168
    %120 = vst.msk [vmem:[%s3] sm:$0xff] %vm119, %v118
    %vm121 = vcmask 15368
    %v122 = vsel %vm121, %v107, 0.0
    %v123 = vrot.slane %v122, 4
    %v124 = vadd.f32 %v122, %v123
    %v125 = vrot.slane %v124, 2
    %v126 = vadd.f32 %v124, %v125
    %v127 = vrot.slane %v126, 1
    %v128 = vadd.f32 %v126, %v127
    %130 = vrot.lane.b32.xlu0 %v128, 127
    %v131 = vpop.permute.xlu0 %130
    %vm133 = vcmask 0
    %134 = vst.msk [vmem:[#allocation3] sm:$0x1] %vm133, %v131
    // Predicated region
    $region14: #{basic_model_forward.1} parent=1 // pred_check
      _
    $region15: #{basic_model_forward.1} parent=1 // pred_check_branch
      %136 = sbr.rel (0) target = $region17
    $region16: #{basic_model_forward.1} parent=1 // pred_region
      _
    $region17: #{basic_model_forward.1} parent=1 // pred_fallthru
      _
    // Predicated region
    $region18: #{basic_model_forward.1} parent=1 // pred_check
      _
    $region19: #{basic_model_forward.1} parent=1 // pred_check_branch
      %138 = sbr.rel (0) target = $region21
    $region20: #{basic_model_forward.1} parent=1 // pred_region
      %s140 = ssub.s32 16, 16
      %141 = vsyncadd [#allocation4], %s140
      %s143 = sshll.u32 [#allocation3], 4
      %s144 = int_to_ptr.vmem [resolvable:$true] %s143
      %146 = dma.vmem_to_hbm [thread:$0]  %s144, 16, %s4, [#allocation4]
    $region21: #{basic_model_forward.1} parent=1 // pred_fallthru
      _
    // Predicated region
    $region22: #{basic_model_forward.1} parent=1 // pred_check
      _
    $region23: #{basic_model_forward.1} parent=1 // pred_check_branch
      %148 = sbr.rel (0) target = $region25
    $region24: #{basic_model_forward.1} parent=1 // pred_region
      _
    $region25: #{basic_model_forward.1} parent=1 // pred_fallthru
      _
    // Predicated region
    $region26: #{basic_model_forward.1} parent=1 // pred_check
      _
    $region27: #{basic_model_forward.1} parent=1 // pred_check_branch
      %150 = sbr.rel (0) target = $region29
    $region28: #{basic_model_forward.1} parent=1 // pred_region
      %151 = dma.done [#allocation4], 16
    $region29: #{basic_model_forward.1} parent=1 // pred_fallthru
      _
    %152 = vsyncpa [#allocation4], 1

</llo_original>
